<compile_context>
chip_gen: v5e
topology: v5e:2x2
jax: 0.10.0
libtpu: 0.0.40
codegen_flags: <defaults>
</compile_context>

<pallas_src>
import math

import jax
import jax.numpy as jnp
from jax.experimental import pallas as pl
from jax.experimental.pallas import tpu as pltpu


_SQRT_2_OVER_PI = 0.7978845608028654  # sqrt(2 / pi)


def mlp_kernel(x_ref, w1_ref, b1_ref, w2_ref, b2_ref, o_ref, acc_ref):
    # x_ref:  (tm, C)  activation row tile (resident across the h axis)
    # w1_ref: (C, th)  c_fc weight column tile
    # b1_ref: (1, th)  c_fc bias tile
    # w2_ref: (th, C)  c_proj weight row tile
    # b2_ref: (1, C)   c_proj bias (only used to seed the accumulator)
    # o_ref:  (tm, C)  output row tile (written once, on the last h step)
    # acc_ref:(tm, C)  f32 VMEM accumulator, persists across the h axis
    h_idx = pl.program_id(1)

    # Seed the accumulator with the c_proj bias (removes a separate full-size
    # (tm, C) add in the finalize path).
    @pl.when(h_idx == 0)
    def _():
        acc_ref[...] = jnp.broadcast_to(
            b2_ref[...].astype(jnp.float32), acc_ref.shape)

    # c_fc for this hidden-column tile: native-dtype operands on the MXU,
    # f32 accumulation.
    h = jnp.dot(x_ref[...], w1_ref[...], preferred_element_type=jnp.float32)
    h = h + b1_ref[...].astype(jnp.float32)

    # tanh-GELU in f32 (matches torch.nn.GELU(approximate='tanh')); tanh hits
    # the EUP slot, the few VPU muls hide under MXU work.  Kept in f32 so v5e
    # (no bf16 VPU/EUP) stays on its fast path.
    g = 0.5 * h * (1.0 + jnp.tanh(_SQRT_2_OVER_PI * (h + 0.044715 * h * h * h)))

    # Partial c_proj contribution of this hidden tile; cast the activation back
    # to the weight dtype so bf16 weights keep the MXU at peak rate.
    acc_ref[...] += jnp.dot(g.astype(w2_ref.dtype), w2_ref[...],
                            preferred_element_type=jnp.float32)

    @pl.when(h_idx == pl.num_programs(1) - 1)
    def _():
        o_ref[...] = acc_ref[...].astype(o_ref.dtype)


def _round_up(a, b):
    return ((a + b - 1) // b) * b


def _pick_row_tile(M, tm_req):
    tm = min(tm_req, _round_up(M, 8))
    return max(8, (tm // 8) * 8)


def _pick_hidden_tile(H, th_req):
    # th must be a multiple of 128 (lane dim of the W1 block) or equal H, and
    # must divide H exactly so the reduction never sums garbage hidden columns.
    if H % 128 != 0:
        return H
    th = max(128, (min(th_req, H) // 128) * 128)
    while H % th != 0:
        th -= 128
    return th


def _vmem_capacity_bytes():
    # Hardware introspection only (not kernel compilation); fall back to the
    # smallest per-core VMEM (v7x, 64 MiB) if the query is unavailable.
    try:
        return int(pltpu.get_tpu_info().vmem_capacity_bytes)
    except Exception:  # introspection fallback only, never hides kernel errors
        return 64 << 20


def mlp_pallas(x, w1, b1, w2, b2, *, tm=None, th=512, compute_dtype=None):
    """Fused GPT-2 MLP forward.

    x: (B, T, C); w1: (C, 4C); b1: (4C,); w2: (4C, C); b2: (C,).
    nn.Linear weights are (out, in); pass their (in, out) transposes here.
    compute_dtype: optionally cast x/W1/W2 (e.g. to bf16) before the kernel;
    accumulation and GELU stay f32, output keeps the original x dtype.
    """
    B, T, C = x.shape
    H = w1.shape[1]
    M = B * T
    out_dtype = x.dtype

    if compute_dtype is not None:
        x = x.astype(compute_dtype)
        w1 = w1.astype(compute_dtype)
        w2 = w2.astype(compute_dtype)

    x2 = x.reshape(M, C)
    b1_2 = b1.reshape(1, H)
    b2_2 = b2.reshape(1, C)

    cap = _vmem_capacity_bytes()
    if tm is None:
        # 512 rows on 128-MiB-VMEM chips (v5e/v6e), 256 on v7x (64 MiB).
        tm = 512 if cap >= (100 << 20) else 256
    tm_eff = _pick_row_tile(M, tm)
    th_eff = _pick_hidden_tile(H, th)

    grid = (pl.cdiv(M, tm_eff), H // th_eff)

    # VMEM budget from the actual per-step footprint: double-buffered x/out
    # row tiles and W1/W2 hidden tiles, sublane-padded biases, the f32
    # accumulator scratch, and ~4 live (tm, th) f32 GELU temporaries + slack.
    a_item = x.dtype.itemsize
    w_item = w1.dtype.itemsize
    vmem_needed = (
        2 * tm_eff * C * a_item                      # x tile (double-buffered)
        + 2 * tm_eff * C * a_item                    # out tile
        + 2 * C * th_eff * w_item                    # W1 tile
        + 2 * th_eff * C * w_item                    # W2 tile
        + 2 * 8 * max(th_eff, 128) * b1.dtype.itemsize   # b1 (padded)
        + 2 * 8 * max(C, 128) * b2.dtype.itemsize        # b2 (padded)
        + tm_eff * C * 4                             # f32 accumulator scratch
        + 5 * tm_eff * th_eff * 4                    # GELU temporary chain
        + (4 << 20)                                  # compiler scratch slack
    )
    vmem_limit = int(min(int(0.75 * cap), max(32 << 20, vmem_needed)))

    grid_spec = pltpu.PrefetchScalarGridSpec(
        num_scalar_prefetch=0,
        grid=grid,
        in_specs=[
            pl.BlockSpec((tm_eff, C), lambda i, h: (i, 0)),   # x (resident over h)
            pl.BlockSpec((C, th_eff), lambda i, h: (0, h)),   # W1 column tile
            pl.BlockSpec((1, th_eff), lambda i, h: (0, h)),   # b1 tile
            pl.BlockSpec((th_eff, C), lambda i, h: (h, 0)),   # W2 row tile
            pl.BlockSpec((1, C), lambda i, h: (0, 0)),        # b2 (tiny, resident)
        ],
        out_specs=pl.BlockSpec((tm_eff, C), lambda i, h: (i, 0)),
        scratch_shapes=[pltpu.VMEM((tm_eff, C), jnp.float32)],
    )

    # NOTE: for C < 128 (like the toy test config) the (tm, C) output tile is
    # store-masked; real GPT-2 shapes (C >= 768) are lane-dense, so no wrapper
    # reshaping is done here.
    out2 = pl.pallas_call(
        mlp_kernel,
        out_shape=jax.ShapeDtypeStruct((M, C), out_dtype),
        grid_spec=grid_spec,
        compiler_params=pltpu.CompilerParams(
            dimension_semantics=("parallel", "arbitrary"),
            vmem_limit_bytes=vmem_limit),
    )(x2, w1, b1_2, w2, b2_2)

    return out2.reshape(B, T, C)


def mlp_reference(x, w1, b1, w2, b2):
    """f32 reference of the PyTorch MLP forward (tanh-approximate GELU)."""
    xf = x.astype(jnp.float32)
    h = xf @ w1.astype(jnp.float32) + b1.astype(jnp.float32)
    h = 0.5 * h * (1.0 + jnp.tanh(math.sqrt(2.0 / math.pi) * (h + 0.044715 * h ** 3)))
    return h @ w2.astype(jnp.float32) + b2.astype(jnp.float32)


def _make_params(key, C, H, dtype=jnp.float32):
    k1, kb1, k2, kb2 = jax.random.split(key, 4)
    w1 = (jax.random.normal(k1, (C, H), dtype=jnp.float32) / math.sqrt(C)).astype(dtype)
    b1 = (jax.random.normal(kb1, (H,), dtype=jnp.float32) * 0.01).astype(dtype)
    w2 = (jax.random.normal(k2, (H, C), dtype=jnp.float32) / math.sqrt(H)).astype(dtype)
    b2 = (jax.random.normal(kb2, (C,), dtype=jnp.float32) * 0.01).astype(dtype)
    return w1, b1, w2, b2


if __name__ == "__main__":
    key = jax.random.PRNGKey(0)
    kp1, kx1, kp2, kx2 = jax.random.split(key, 4)

    # 1) Small GPT-2-like config (n_embd=32 -> hidden=128), single tile on
    #    both grid axes, f32.
    C, H = 32, 4 * 32
    B, T = 2, 8
    w1, b1, w2, b2 = _make_params(kp1, C, H)
    x = jax.random.normal(kx1, (B, T, C), dtype=jnp.float32)
    out = mlp_pallas(x, w1, b1, w2, b2)
    jax.block_until_ready(out)
    ref = mlp_reference(x, w1, b1, w2, b2)
    assert out.shape == (B, T, C)
    assert jnp.allclose(out.astype(jnp.float32), ref, atol=1e-4, rtol=1e-4), \
        "f32 single-tile mismatch vs reference"

    # 2) Multi-tile path: ragged row count (M = 2*97 = 194, tm=64 -> 4 row
    #    tiles, last one partial) and 2 hidden tiles (H=256, th=128), f32.
    C2, H2 = 64, 4 * 64
    B2, T2 = 2, 97
    w1b, b1b, w2b, b2b = _make_params(kp2, C2, H2)
    x_big = jax.random.normal(kx2, (B2, T2, C2), dtype=jnp.float32)
    out_big = mlp_pallas(x_big, w1b, b1b, w2b, b2b, tm=64, th=128)
    jax.block_until_ready(out_big)
    ref_big = mlp_reference(x_big, w1b, b1b, w2b, b2b)
    assert jnp.allclose(out_big.astype(jnp.float32), ref_big, atol=2e-4, rtol=2e-4), \
        "multi-tile f32 mismatch vs reference"

    # 3) bf16 operands (native MXU dtype path) via the wrapper-side cast,
    #    f32 accumulation + f32 GELU in-kernel.
    xb = x_big.astype(jnp.bfloat16)
    w1c, b1c, w2c, b2c = (a.astype(jnp.bfloat16) for a in (w1b, b1b, w2b, b2b))
    out_bf = mlp_pallas(xb, w1c, b1c, w2c, b2c, tm=64, th=128)
    jax.block_until_ready(out_bf)
    ref_bf = mlp_reference(xb, w1c, b1c, w2c, b2c)  # f32 math on bf16-cast values
    assert jnp.allclose(out_bf.astype(jnp.float32), ref_bf, atol=1e-1, rtol=1e-1), \
        "bf16 mismatch vs reference"

    print("KERNEL_OK")
</pallas_src>

<mosaic_0001>
module attributes {stable_mosaic.version = 11 : i64} {
  func.func @mlp_kernel(%arg0: i32, %arg1: i32, %arg2: memref<16x32xf32, #tpu.memory_space<vmem>>, %arg3: memref<32x128xf32, #tpu.memory_space<vmem>>, %arg4: memref<1x128xf32, #tpu.memory_space<vmem>>, %arg5: memref<128x32xf32, #tpu.memory_space<vmem>>, %arg6: memref<1x32xf32, #tpu.memory_space<vmem>>, %arg7: memref<16x32xf32, #tpu.memory_space<vmem>>, %arg8: memref<16x32xf32, #tpu.memory_space<vmem>>) attributes {dimension_semantics = [#tpu.dimension_semantics<parallel>, #tpu.dimension_semantics<arbitrary>], iteration_bounds = array<i64: 1, 1>, scalar_prefetch = 0 : i64, scratch_operands = 1 : i64, tpu.core_type = #tpu.core_type<tc>, window_params = [{transform_indices = @transform_0, window_bounds = array<i64: 16, 32>}, {transform_indices = @transform_1, window_bounds = array<i64: 32, 128>}, {transform_indices = @transform_2, window_bounds = array<i64: 1, 128>}, {transform_indices = @transform_3, window_bounds = array<i64: 128, 32>}, {pipeline_mode = #tpu.pipeline_mode<synchronous>, transform_indices = @transform_4, window_bounds = array<i64: 1, 32>}, {transform_indices = @transform_5, window_bounds = array<i64: 16, 32>}]} {
    %c0_i32 = arith.constant 0 : i32
    %0 = arith.cmpi eq, %arg1, %c0_i32 : i32
    %1 = arith.extui %0 : i1 to i32
    %c0_i32_0 = arith.constant 0 : i32
    %2 = arith.cmpi ne, %1, %c0_i32_0 : i32
    scf.if %2 {
      %c0_19 = arith.constant 0 : index
      %c0_20 = arith.constant 0 : index
      %30 = vector.load %arg6[%c0_19, %c0_20] : memref<1x32xf32, #tpu.memory_space<vmem>>, vector<1x32xf32>
      %31 = vector.shape_cast %30 : vector<1x32xf32> to vector<1x32xf32>
      %32 = vector.broadcast %31 : vector<1x32xf32> to vector<16x32xf32>
      %c0_21 = arith.constant 0 : index
      %c0_22 = arith.constant 0 : index
      %33 = vector.load %arg8[%c0_21, %c0_22] : memref<16x32xf32, #tpu.memory_space<vmem>>, vector<16x32xf32>
      tpu.vector_store %arg8[%c0_21, %c0_22], %32 {strides = array<i32>} : memref<16x32xf32, #tpu.memory_space<vmem>>, vector<16x32xf32>,
    } else {
    }
    %c0 = arith.constant 0 : index
    %c0_1 = arith.constant 0 : index
    %3 = vector.load %arg2[%c0, %c0_1] : memref<16x32xf32, #tpu.memory_space<vmem>>, vector<16x32xf32>
    %c0_2 = arith.constant 0 : index
    %c0_3 = arith.constant 0 : index
    %4 = vector.load %arg3[%c0_2, %c0_3] : memref<32x128xf32, #tpu.memory_space<vmem>>, vector<32x128xf32>
    %cst = arith.constant dense<0.000000e+00> : vector<16x128xf32>
    %5 = tpu.matmul %3, %4, %cst {dimension_numbers = #tpu.dot_dimension_numbers<[1], [0], [0], [1], [0, 0, 1, 1], [], []>} : vector<16x32xf32>, vector<32x128xf32>, vector<16x128xf32> -> vector<16x128xf32>
    %c0_4 = arith.constant 0 : index
    %c0_5 = arith.constant 0 : index
    %6 = vector.load %arg4[%c0_4, %c0_5] : memref<1x128xf32, #tpu.memory_space<vmem>>, vector<1x128xf32>
    %7 = vector.broadcast %6 : vector<1x128xf32> to vector<16x128xf32>
    %8 = arith.addf %5, %7 : vector<16x128xf32>
    %cst_6 = arith.constant 5.000000e-01 : f32
    %9 = vector.broadcast %cst_6 : f32 to vector<16x128xf32>
    %10 = arith.mulf %9, %8 : vector<16x128xf32>
    %cst_7 = arith.constant 4.471500e-02 : f32
    %11 = vector.broadcast %cst_7 : f32 to vector<16x128xf32>
    %12 = arith.mulf %11, %8 : vector<16x128xf32>
    %13 = arith.mulf %12, %8 : vector<16x128xf32>
    %14 = arith.mulf %13, %8 : vector<16x128xf32>
    %15 = arith.addf %8, %14 : vector<16x128xf32>
    %cst_8 = arith.constant 0.797884583 : f32
    %16 = vector.broadcast %cst_8 : f32 to vector<16x128xf32>
    %17 = arith.mulf %16, %15 : vector<16x128xf32>
    %18 = math.tanh %17 : vector<16x128xf32>
    %cst_9 = arith.constant 1.000000e+00 : f32
    %19 = vector.broadcast %cst_9 : f32 to vector<16x128xf32>
    %20 = arith.addf %19, %18 : vector<16x128xf32>
    %21 = arith.mulf %10, %20 : vector<16x128xf32>
    %c0_10 = arith.constant 0 : index
    %c0_11 = arith.constant 0 : index
    %22 = vector.load %arg8[%c0_10, %c0_11] : memref<16x32xf32, #tpu.memory_space<vmem>>, vector<16x32xf32>
    %c0_12 = arith.constant 0 : index
    %c0_13 = arith.constant 0 : index
    %23 = vector.load %arg5[%c0_12, %c0_13] : memref<128x32xf32, #tpu.memory_space<vmem>>, vector<128x32xf32>
    %cst_14 = arith.constant dense<0.000000e+00> : vector<16x32xf32>
    %24 = tpu.matmul %21, %23, %cst_14 {dimension_numbers = #tpu.dot_dimension_numbers<[1], [0], [0], [1], [0, 0, 1, 1], [], []>} : vector<16x128xf32>, vector<128x32xf32>, vector<16x32xf32> -> vector<16x32xf32>
    %25 = arith.addf %22, %24 : vector<16x32xf32>
    %c0_15 = arith.constant 0 : index
    %c0_16 = arith.constant 0 : index
    %26 = vector.load %arg8[%c0_15, %c0_16] : memref<16x32xf32, #tpu.memory_space<vmem>>, vector<16x32xf32>
    tpu.vector_store %arg8[%c0_15, %c0_16], %25 {strides = array<i32>} : memref<16x32xf32, #tpu.memory_space<vmem>>, vector<16x32xf32>,
    %c0_i32_17 = arith.constant 0 : i32
    %27 = arith.cmpi eq, %arg1, %c0_i32_17 : i32
    %28 = arith.extui %27 : i1 to i32
    %c0_i32_18 = arith.constant 0 : i32
    %29 = arith.cmpi ne, %28, %c0_i32_18 : i32
    scf.if %29 {
      %c0_19 = arith.constant 0 : index
      %c0_20 = arith.constant 0 : index
      %30 = vector.load %arg8[%c0_19, %c0_20] : memref<16x32xf32, #tpu.memory_space<vmem>>, vector<16x32xf32>
      %c0_21 = arith.constant 0 : index
      %c0_22 = arith.constant 0 : index
      %31 = vector.load %arg7[%c0_21, %c0_22] : memref<16x32xf32, #tpu.memory_space<vmem>>, vector<16x32xf32>
      tpu.vector_store %arg7[%c0_21, %c0_22], %30 {strides = array<i32>} : memref<16x32xf32, #tpu.memory_space<vmem>>, vector<16x32xf32>,
    } else {
    }
    return
  }
  func.func @transform_0(%arg0: i32, %arg1: i32) -> (i32, i32) {
    %c0_i32 = arith.constant 0 : i32
    %c0_i32_0 = arith.constant 0 : i32
    return %arg0, %c0_i32 : i32, i32
  }
  func.func @transform_1(%arg0: i32, %arg1: i32) -> (i32, i32) {
    %c0_i32 = arith.constant 0 : i32
    %c0_i32_0 = arith.constant 0 : i32
    return %c0_i32, %arg1 : i32, i32
  }
  func.func @transform_2(%arg0: i32, %arg1: i32) -> (i32, i32) {
    %c0_i32 = arith.constant 0 : i32
    %c0_i32_0 = arith.constant 0 : i32
    return %c0_i32, %arg1 : i32, i32
  }
  func.func @transform_3(%arg0: i32, %arg1: i32) -> (i32, i32) {
    %c0_i32 = arith.constant 0 : i32
    %c0_i32_0 = arith.constant 0 : i32
    return %arg1, %c0_i32 : i32, i32
  }
  func.func @transform_4(%arg0: i32, %arg1: i32) -> (i32, i32) {
    %c0_i32 = arith.constant 0 : i32
    %c0_i32_0 = arith.constant 0 : i32
    %c0_i32_1 = arith.constant 0 : i32
    return %c0_i32, %c0_i32_0 : i32, i32
  }
  func.func @transform_5(%arg0: i32, %arg1: i32) -> (i32, i32) {
    %c0_i32 = arith.constant 0 : i32
    %c0_i32_0 = arith.constant 0 : i32
    return %arg0, %c0_i32 : i32, i32
  }
}

</mosaic_0001>

<llo_original>
// kernel: tpu_custom_call.1
$region0: #{tpu_custom_call.1}
  #allocation0 [shape = 'u32[]', space=smem, size = 0x4, offset = 0x4, fixed_abs, tag = 'smem constant byte address 0x4 - core index']
  #allocation1 [shape = 'u32[72,128]{1,0:T(1,128)}', space=vmem, size = 0x9000, scoped, tag = 'internal scratch']
  #allocation2 [shape = 'f32[16,32]{1,0:T(8,128)}', space=vmem, size = 0x2000, scoped, tag = 'scratch operand']
  %s0 = inlined_call_operand.vmem [shape: f32[16,32], index: 0, kind: input, shape index: {}]
  %s1 = inlined_call_operand.vmem [shape: f32[32,128], index: 1, kind: input, shape index: {}]
  %s2 = inlined_call_operand.vmem [shape: f32[1,128], index: 2, kind: input, shape index: {}]
  %s3 = inlined_call_operand.vmem [shape: f32[128,32], index: 3, kind: input, shape index: {}]
  %s4 = inlined_call_operand.vmem [shape: f32[1,32], index: 4, kind: input, shape index: {}]
  %s5 = inlined_call_operand.hbm [shape: f32[16,32], index: 5, kind: output, shape index: {}]
  %s6 = sld [smem:[#allocation0]]
  $region38: #{tpu_custom_call.1} parent=0
    _
  %s8 = ssub.s32 1, %s6
  %s9 = scalar_select 0, %s8, %s6
  $region1: #{tpu_custom_call.1} parent=0
    #allocation3 [shape = 'u8[8192]{0}', space=vmem, size = 0x2000, scoped, tag = 'output window, operand 0, single buffered']
    #allocation4 [shape = 's32[1]{0}', space=sflag, size = 0x4, scoped, tag = 'scoped memory for tpu_custom_call.1']
    %10 = vsyncpa [#allocation4], 0
    // Predicated region
    $region2: #{tpu_custom_call.1} parent=1 // pred_check
      _
    $region3: #{tpu_custom_call.1} parent=1 // pred_check_branch
      %12 = sbr.rel (0) target = $region5
    $region4: #{tpu_custom_call.1} parent=1 // pred_region
      _
    $region5: #{tpu_custom_call.1} parent=1 // pred_fallthru
      _
    // Predicated region
    $region6: #{tpu_custom_call.1} parent=1 // pred_check
      _
    $region7: #{tpu_custom_call.1} parent=1 // pred_check_branch
      %14 = sbr.rel (0) target = $region9
    $region8: #{tpu_custom_call.1} parent=1 // pred_region
      _
    $region9: #{tpu_custom_call.1} parent=1 // pred_fallthru
      _
    // Predicated region
    $region10: #{tpu_custom_call.1} parent=1 // pred_check
      _
    $region11: #{tpu_custom_call.1} parent=1 // pred_check_branch
      %16 = sbr.rel (0) target = $region13
    $region12: #{tpu_custom_call.1} parent=1 // pred_region
      _
    $region13: #{tpu_custom_call.1} parent=1 // pred_fallthru
      _
    // Predicated region
    $region14: #{tpu_custom_call.1} parent=1 // pred_check
      _
    $region15: #{tpu_custom_call.1} parent=1 // pred_check_branch
      %18 = sbr.rel (0) target = $region17
    $region16: #{tpu_custom_call.1} parent=1 // pred_region
      _
    $region17: #{tpu_custom_call.1} parent=1 // pred_fallthru
      _
    // Predicated region
    $region18: #{tpu_custom_call.1} parent=1 // pred_check
      _
    $region19: #{tpu_custom_call.1} parent=1 // pred_check_branch
      %20 = sbr.rel (0) target = $region21
    $region20: #{tpu_custom_call.1} parent=1 // pred_region
      _
    $region21: #{tpu_custom_call.1} parent=1 // pred_fallthru
      _
    %p21 = scmp.eq.s32.totalorder 0, 0
    // Predicated region
    $region22: #{tpu_custom_call.1} parent=1 // pred_check
      %p22 = pneg %p21
    $region23: #{tpu_custom_call.1} parent=1 // pred_check_branch
      %24 = sbr.rel (%p22) target = $region25
    $region24: #{tpu_custom_call.1} parent=1 // pred_region
      %v25 = vld [vmem:[%s4] sm:$0x1]
      %v27 = vperm.slane %v25, 0
      %vm29 = vcmask 261120
      %30 = vst.msk [vmem:[#allocation2] sm:$0xff] %vm29, %v27
      %31 = vst.msk [vmem:[#allocation2 + $0x8] sm:$0xff] %vm29, %v27
    $region25: #{tpu_custom_call.1} parent=1 // pred_fallthru
      _
    %v32 = vld [vmem:[%s0] sm:$0xff]
    %v33 = vld [vmem:[%s0 + $0x8] sm:$0xff]
    %v34 = vld [vmem:[%s1] sm:$0xff]
    %v35 = vld [vmem:[%s1 + $0x8] sm:$0xff]
    %v36 = vld [vmem:[%s1 + $0x10] sm:$0xff]
    %v37 = vld [vmem:[%s1 + $0x18] sm:$0xff]
    %v38 = vld [vmem:[%s2] sm:$0x1]
    %v40 = vperm.slane %v38, 0
    %vm42 = vcmask 261120
    %v44 = vsel %vm42, %v32, 0
    %v47 = vsel %vm42, %v33, 0
    %49 = vmatpush.msra.mxu0 0.0
    %50 = vmatpush.msra.mxu0 0.0
    %51 = vmatpush.msra.mxu0 0.0
    %52 = vmatpush.msra.mxu0 0.0
    %53 = vmatpush.msra.mxu0 0.0
    %54 = vmatpush.msra.mxu0 0.0
    %55 = vmatpush.msra.mxu0 0.0
    %56 = vmatpush.msra.mxu0 0.0
    %57 = vmatpush.msra.mxu0 0.0
    %58 = vmatpush.msra.mxu0 0.0
    %59 = vmatpush.msra.mxu0 0.0
    %60 = vmatpush.msra.mxu0 0.0
    %61 = vmatpush.msra.mxu0 %v37
    %62 = vmatpush.msra.mxu0 %v36
    %63 = vmatpush.msra.mxu0 %v35
    %64 = vmatpush.msra.mxu0 %v34
    %65 = vmatmul.f32.gmra.mxu0 %v44
    %v66 = vpop.f32.mrf.mxu0
    %v67 = vadd.f32 %v40, %v66
    %68 = vmatmul.f32.gmra.mxu0 %v47
    %v69 = vpop.f32.mrf.mxu0
    %v70 = vadd.f32 %v40, %v69
    %71 = vdwg.mxu0
    %v72 = vmul.f32 %v67, 0.5
    %v73 = vmul.f32 %v70, 0.5
    %v74 = vmul.f32 %v67, 0.044715
    %v75 = vmul.f32 %v70, 0.044715
    %v76 = vmul.f32 %v74, %v67
    %v77 = vmul.f32 %v75, %v70
    %v78 = vmul.f32 %v76, %v67
    %v79 = vmul.f32 %v77, %v70
    %v80 = vadd.f32 %v67, %v78
    %v81 = vadd.f32 %v70, %v79
    %v82 = vmul.f32 %v80, 0.7978846
    %v83 = vmul.f32 %v81, 0.7978846
    %v84 = vtanh.pop %v82
    %v85 = vtanh.pop %v83
    %v86 = vadd.f32 %v84, 1.0
    %v87 = vadd.f32 %v85, 1.0
    %v88 = vmul.f32 %v72, %v86
    %v89 = vmul.f32 %v73, %v87
    %v90 = vld [vmem:[#allocation2] sm:$0xff]
    %v91 = vld [vmem:[#allocation2 + $0x8] sm:$0xff]
    %v92 = vld [vmem:[%s3] sm:$0xff]
    %v93 = vld [vmem:[%s3 + $0x8] sm:$0xff]
    %v94 = vld [vmem:[%s3 + $0x10] sm:$0xff]
    %v95 = vld [vmem:[%s3 + $0x18] sm:$0xff]
    %v96 = vld [vmem:[%s3 + $0x20] sm:$0xff]
    %v97 = vld [vmem:[%s3 + $0x28] sm:$0xff]
    %v98 = vld [vmem:[%s3 + $0x30] sm:$0xff]
    %v99 = vld [vmem:[%s3 + $0x38] sm:$0xff]
    %v100 = vld [vmem:[%s3 + $0x40] sm:$0xff]
    %v101 = vld [vmem:[%s3 + $0x48] sm:$0xff]
    %v102 = vld [vmem:[%s3 + $0x50] sm:$0xff]
    %v103 = vld [vmem:[%s3 + $0x58] sm:$0xff]
    %v104 = vld [vmem:[%s3 + $0x60] sm:$0xff]
    %v105 = vld [vmem:[%s3 + $0x68] sm:$0xff]
    %v106 = vld [vmem:[%s3 + $0x70] sm:$0xff]
    %v107 = vld [vmem:[%s3 + $0x78] sm:$0xff]
    %108 = vmatpush.msra.mxu0 %v107
    %109 = vmatpush.msra.mxu0 %v106
    %110 = vmatpush.msra.mxu0 %v105
    %111 = vmatpush.msra.mxu0 %v104
    %112 = vmatpush.msra.mxu0 %v103
    %113 = vmatpush.msra.mxu0 %v102
    %114 = vmatpush.msra.mxu0 %v101
    %115 = vmatpush.msra.mxu0 %v100
    %116 = vmatpush.msra.mxu0 %v99
    %117 = vmatpush.msra.mxu0 %v98
    %118 = vmatpush.msra.mxu0 %v97
    %119 = vmatpush.msra.mxu0 %v96
    %120 = vmatpush.msra.mxu0 %v95
    %121 = vmatpush.msra.mxu0 %v94
    %122 = vmatpush.msra.mxu0 %v93
    %123 = vmatpush.msra.mxu0 %v92
    %124 = vmatmul.f32.gmra.mxu0 %v88
    %v125 = vpop.f32.mrf.mxu0
    %v126 = vadd.f32 0.0, %v125
    %127 = vmatmul.f32.gmra.mxu0 %v89
    %v128 = vpop.f32.mrf.mxu0
    %v129 = vadd.f32 0.0, %v128
    %130 = vdwg.mxu0
    %v131 = vadd.f32 %v90, %v126
    %v132 = vadd.f32 %v91, %v129
    %133 = vst.msk [vmem:[#allocation2] sm:$0xff] %vm42, %v131
    %134 = vst.msk [vmem:[#allocation2 + $0x8] sm:$0xff] %vm42, %v132
    // Predicated region
    $region26: #{tpu_custom_call.1} parent=1 // pred_check
      %p135 = pneg %p21
    $region27: #{tpu_custom_call.1} parent=1 // pred_check_branch
      %137 = sbr.rel (%p135) target = $region29
    $region28: #{tpu_custom_call.1} parent=1 // pred_region
      %v138 = vld [vmem:[#allocation2] sm:$0xff]
      %v139 = vld [vmem:[#allocation2 + $0x8] sm:$0xff]
      %140 = vst.msk [vmem:[#allocation3] sm:$0xff] %vm42, %v138
      %141 = vst.msk [vmem:[#allocation3 + $0x8] sm:$0xff] %vm42, %v139
    $region29: #{tpu_custom_call.1} parent=1 // pred_fallthru
      _
    // Predicated region
    $region30: #{tpu_custom_call.1} parent=1 // pred_check
      _
    $region31: #{tpu_custom_call.1} parent=1 // pred_check_branch
      %143 = sbr.rel (0) target = $region33
    $region32: #{tpu_custom_call.1} parent=1 // pred_region
      %145 = vsyncadd [#allocation4], 0
      %s146 = sshll.u32 [#allocation3], 4
      %s147 = int_to_ptr.vmem [resolvable:$true] %s146
      %s148 = sshll.u32 %s5, 4
      %s149 = int_to_ptr.hbm [resolvable:$true] %s148
      %154 = dma.vmem_to_hbm [thread:$0]  %s147, 256, %s149, [#allocation4], 128, 128, 8
    $region33: #{tpu_custom_call.1} parent=1 // pred_fallthru
      _
    // Predicated region
    $region34: #{tpu_custom_call.1} parent=1 // pred_check
      _
    $region35: #{tpu_custom_call.1} parent=1 // pred_check_branch
      %156 = sbr.rel (0) target = $region37
    $region36: #{tpu_custom_call.1} parent=1 // pred_region
      %158 = dma.done [#allocation4], 256
    $region37: #{tpu_custom_call.1} parent=1 // pred_fallthru
      _
    %159 = vsyncpa [#allocation4], 1

</llo_original>
